<compile_context>
chip_gen: v5e
topology: v5e:2x2
jax: 0.10.0
libtpu: 0.0.40
codegen_flags: <defaults>
</compile_context>

<pallas_src>
import functools

import jax
import jax.numpy as jnp
from jax import lax
from jax.experimental import pallas as pl
from jax.experimental.pallas import tpu as pltpu

BN_EPS = 1e-5  # PyTorch BatchNorm1d default

# Static problem sizes implied by the module: Conv1d(2,2,2) -> Linear(2,2).
CIN, COUT, K = 2, 2, 2
FOUT = 2
LIN = 3                  # conv output length = LIN - K + 1 = 2 == fc in_features
LOUT = LIN - K + 1

# Column layout of the single packed input array (rows = CIN == COUT == 2):
_OFF_X1 = 0                          # K lane-aligned im2col shifts, each LOUT wide
_OFF_WC = _OFF_X1 + K * LOUT         # conv weight, reshaped (COUT, CIN*K)
_OFF_WF = _OFF_WC + CIN * K          # fc weight transposed, (LOUT, FOUT)
_OFF_BC = _OFF_WF + FOUT             # combined bias b_comb, (COUT, FOUT)
_OFF_G = _OFF_BC + FOUT              # bn gamma, (COUT, 1)
_OFF_B = _OFF_G + 1                  # bn beta,  (COUT, 1)
_OFF_X2 = _OFF_B + 1                 # residual input_2, (COUT, FOUT)
PACK_COLS = _OFF_X2 + FOUT           # == 16
PARAM_COLS = _OFF_X2 - _OFF_WC       # static (per-model) parameter columns == 10


def fused_kernel(pack_ref, o_ref):
    pack = pack_ref[...]                                 # (2, PACK_COLS)

    wc = pack[:, _OFF_WC:_OFF_WC + CIN * K]              # (COUT, CIN*K)
    wf_t = pack[:, _OFF_WF:_OFF_WF + FOUT]               # (LOUT, FOUT)
    b_comb = pack[:, _OFF_BC:_OFF_BC + FOUT]             # (COUT, FOUT)
    gamma = pack[:, _OFF_G:_OFF_G + 1]                   # (COUT, 1)
    beta = pack[:, _OFF_B:_OFF_B + 1]                    # (COUT, 1)
    x2 = pack[:, _OFF_X2:_OFF_X2 + FOUT]                 # (COUT, FOUT)

    # Conv1d as fully unrolled VPU broadcast-MACs over lane-aligned, host
    # pre-shifted im2col rows; accumulator initialized with the first product.
    y = None
    for k in range(K):
        xs_k = pack[:, _OFF_X1 + k * LOUT:_OFF_X1 + (k + 1) * LOUT]  # (CIN, LOUT)
        for ci in range(CIN):
            term = wc[:, ci * K + k:ci * K + k + 1] * xs_k[ci:ci + 1, :]
            y = term if y is None else y + term          # (COUT, LOUT)
    # conv bias + fc bias already folded into b_comb on the host.

    # Linear over the last dim, also unrolled on the VPU (init with the bias).
    z = b_comb
    for l in range(LOUT):
        z = z + y[:, l:l + 1] * wf_t[l:l + 1, :]         # (COUT,1)*(1,FOUT)

    # BatchNorm1d training-mode statistics (biased var). Batch size is 1, so
    # per-channel stats == per-row stats over the last dim here.
    mean = jnp.mean(z, axis=-1, keepdims=True)
    var = jnp.mean((z - mean) ** 2, axis=-1, keepdims=True)
    zb = (z - mean) * lax.rsqrt(var + BN_EPS) * gamma + beta

    # Softmax over the last dim; exact divide (kernel is overhead-bound, the
    # EUP approx reciprocal bought nothing and cost accuracy).
    m = jnp.max(zb, axis=-1, keepdims=True)
    e = jnp.exp(zb - m)
    p = e / jnp.sum(e, axis=-1, keepdims=True)

    # ReLU(softmax(x)) == softmax(x) since softmax >= 0 -> ReLU omitted.
    o_ref[...] = p + x2


def pack_params(params):
    """Pre-pack the static per-model parameter columns ONCE (hoisted out of the
    per-call path). Returns a (COUT, PARAM_COLS) f32 array."""
    f32 = jnp.float32
    wc = params["conv_w"]       # (COUT, CIN, K)
    bc = params["conv_b"]       # (COUT,)
    wf = params["fc_w"]         # (FOUT, LOUT)
    bf = params["fc_b"]         # (FOUT,)
    gamma = params["bn_gamma"]  # (COUT,)
    beta = params["bn_beta"]    # (COUT,)

    assert wc.shape == (COUT, CIN, K) and wf.shape == (FOUT, LOUT)
    assert COUT == LOUT == FOUT, "packing layout assumes these all match (== 2)"

    wc_mat = wc.reshape(COUT, CIN * K).astype(f32)               # (COUT, CIN*K)
    wf_t = wf.astype(f32).T                                      # (LOUT, FOUT)
    # Fold conv bias through the Linear, together with the fc bias:
    #   b_comb[c, f] = bc[c] * sum_l wf[f, l] + bf[f]
    b_comb = (bc.astype(f32)[:, None] * jnp.sum(wf.astype(f32), axis=1)[None, :]
              + bf.astype(f32)[None, :])                         # (COUT, FOUT)
    pp = jnp.concatenate(
        [wc_mat, wf_t, b_comb,
         gamma.astype(f32)[:, None], beta.astype(f32)[:, None]],
        axis=1)                                                  # (COUT, PARAM_COLS)
    assert pp.shape == (COUT, PARAM_COLS)
    return pp


@jax.jit
def model_forward(input_1, input_2, param_pack):
    """input_1: (1, CIN, LIN), input_2: (1, COUT, FOUT), param_pack from
    pack_params. Returns (1, COUT, FOUT)."""
    f32 = jnp.float32
    N, Cin, Lin = input_1.shape
    assert N == 1, "kernel specialized to batch 1 (matches reference module)"
    assert (Cin, Lin) == (CIN, LIN)
    assert input_2.shape == (1, COUT, FOUT)
    assert param_pack.shape == (COUT, PARAM_COLS)

    x1 = input_1[0].astype(f32)                                  # (CIN, LIN)
    # Lane-aligned im2col shifts laid out on the host (single tiny fused op
    # under jit) so every in-kernel multiplicand starts at lane offset 0.
    shifts = jnp.concatenate([x1[:, k:k + LOUT] for k in range(K)], axis=1)
    pack = jnp.concatenate([shifts, param_pack, input_2[0].astype(f32)], axis=1)

    out = pl.pallas_call(
        fused_kernel,
        out_shape=jax.ShapeDtypeStruct((COUT, FOUT), f32),
        in_specs=[pl.BlockSpec(memory_space=pltpu.MemorySpace.VMEM)],
        out_specs=pl.BlockSpec(memory_space=pltpu.MemorySpace.VMEM),
        cost_estimate=pl.CostEstimate(flops=40, transcendentals=4,
                                      bytes_accessed=200),
    )(pack)
    return out.reshape(1, COUT, FOUT)


def reference(input_1, input_2, params):
    """Pure-JAX reference mirroring the PyTorch forward (train-mode BN)."""
    wc, bc = params["conv_w"], params["conv_b"]
    wf, bf = params["fc_w"], params["fc_b"]
    gamma, beta = params["bn_gamma"], params["bn_beta"]
    N, Cin, Lin = input_1.shape
    Cout, _, Kk = wc.shape
    Lout = Lin - Kk + 1
    y = jnp.stack(
        [jnp.einsum("nck,ock->no", input_1[:, :, l:l + Kk], wc) for l in range(Lout)],
        axis=-1,
    ) + bc[None, :, None]                                   # (N, Cout, Lout)
    z = jnp.einsum("ncl,fl->ncf", y, wf) + bf               # Linear on last dim
    mean = jnp.mean(z, axis=(0, 2), keepdims=True)
    var = jnp.mean((z - mean) ** 2, axis=(0, 2), keepdims=True)
    zb = (z - mean) / jnp.sqrt(var + BN_EPS) * gamma[None, :, None] + beta[None, :, None]
    p = jax.nn.softmax(zb, axis=-1)
    return jnp.maximum(p, 0.0) + input_2


if __name__ == "__main__":
    key = jax.random.PRNGKey(0)
    k1, k2, k3, k4, k5, k6 = jax.random.split(key, 6)

    input_1 = jax.random.normal(k1, (1, CIN, LIN), jnp.float32)
    input_2 = jax.random.normal(k2, (1, COUT, FOUT), jnp.float32)

    params = dict(
        conv_w=jax.random.normal(k3, (COUT, CIN, K), jnp.float32) * 0.5,
        conv_b=jax.random.normal(k4, (COUT,), jnp.float32) * 0.1,
        fc_w=jax.random.normal(k5, (FOUT, LOUT), jnp.float32) * 0.5,
        fc_b=jax.random.normal(k6, (FOUT,), jnp.float32) * 0.1,
        bn_gamma=jnp.ones((COUT,), jnp.float32),   # PyTorch BN default init
        bn_beta=jnp.zeros((COUT,), jnp.float32),
    )

    # Static param packing: done once, reused across calls.
    param_pack = jax.block_until_ready(pack_params(params))

    out = model_forward(input_1, input_2, param_pack)
    jax.block_until_ready(out)

    ref = reference(input_1, input_2, params)
    assert out.shape == (1, COUT, FOUT)
    # Exact softmax reciprocal -> tight tolerance is back.
    assert jnp.allclose(out, ref, atol=1e-5, rtol=1e-5), (out, ref)

    print("KERNEL_OK")
</pallas_src>

<mosaic_0001>
module attributes {stable_mosaic.version = 11 : i64} {
  func.func @fused_kernel(%arg0: memref<2x16xf32, #tpu.memory_space<vmem>>, %arg1: memref<2x2xf32, #tpu.memory_space<vmem>>) attributes {dimension_semantics = [], scalar_prefetch = 0 : i64, scratch_operands = 0 : i64, tpu.core_type = #tpu.core_type<tc>} {
    %c0 = arith.constant 0 : index
    %c0_0 = arith.constant 0 : index
    %0 = vector.load %arg0[%c0, %c0_0] : memref<2x16xf32, #tpu.memory_space<vmem>>, vector<2x16xf32>
    %1 = vector.extract_strided_slice %0 {offsets = [0, 4], sizes = [2, 4], strides = [1, 1]} : vector<2x16xf32> to vector<2x4xf32>
    %2 = vector.extract_strided_slice %0 {offsets = [0, 8], sizes = [2, 2], strides = [1, 1]} : vector<2x16xf32> to vector<2x2xf32>
    %3 = vector.extract_strided_slice %0 {offsets = [0, 10], sizes = [2, 2], strides = [1, 1]} : vector<2x16xf32> to vector<2x2xf32>
    %4 = vector.extract_strided_slice %0 {offsets = [0, 12], sizes = [2, 1], strides = [1, 1]} : vector<2x16xf32> to vector<2x1xf32>
    %5 = vector.extract_strided_slice %0 {offsets = [0, 13], sizes = [2, 1], strides = [1, 1]} : vector<2x16xf32> to vector<2x1xf32>
    %6 = vector.extract_strided_slice %0 {offsets = [0, 14], sizes = [2, 2], strides = [1, 1]} : vector<2x16xf32> to vector<2x2xf32>
    %7 = vector.extract_strided_slice %0 {offsets = [0, 0], sizes = [2, 2], strides = [1, 1]} : vector<2x16xf32> to vector<2x2xf32>
    %8 = vector.extract_strided_slice %1 {offsets = [0, 0], sizes = [2, 1], strides = [1, 1]} : vector<2x4xf32> to vector<2x1xf32>
    %9 = vector.extract_strided_slice %7 {offsets = [0, 0], sizes = [1, 2], strides = [1, 1]} : vector<2x2xf32> to vector<1x2xf32>
    %10 = vector.broadcast %8 : vector<2x1xf32> to vector<2x2xf32>
    %11 = vector.broadcast %9 : vector<1x2xf32> to vector<2x2xf32>
    %12 = arith.mulf %10, %11 : vector<2x2xf32>
    %13 = vector.extract_strided_slice %1 {offsets = [0, 2], sizes = [2, 1], strides = [1, 1]} : vector<2x4xf32> to vector<2x1xf32>
    %14 = vector.extract_strided_slice %7 {offsets = [1, 0], sizes = [1, 2], strides = [1, 1]} : vector<2x2xf32> to vector<1x2xf32>
    %15 = vector.broadcast %13 : vector<2x1xf32> to vector<2x2xf32>
    %16 = vector.broadcast %14 : vector<1x2xf32> to vector<2x2xf32>
    %17 = arith.mulf %15, %16 : vector<2x2xf32>
    %18 = arith.addf %12, %17 : vector<2x2xf32>
    %19 = vector.extract_strided_slice %0 {offsets = [0, 2], sizes = [2, 2], strides = [1, 1]} : vector<2x16xf32> to vector<2x2xf32>
    %20 = vector.extract_strided_slice %1 {offsets = [0, 1], sizes = [2, 1], strides = [1, 1]} : vector<2x4xf32> to vector<2x1xf32>
    %21 = vector.extract_strided_slice %19 {offsets = [0, 0], sizes = [1, 2], strides = [1, 1]} : vector<2x2xf32> to vector<1x2xf32>
    %22 = vector.broadcast %20 : vector<2x1xf32> to vector<2x2xf32>
    %23 = vector.broadcast %21 : vector<1x2xf32> to vector<2x2xf32>
    %24 = arith.mulf %22, %23 : vector<2x2xf32>
    %25 = arith.addf %18, %24 : vector<2x2xf32>
    %26 = vector.extract_strided_slice %1 {offsets = [0, 3], sizes = [2, 1], strides = [1, 1]} : vector<2x4xf32> to vector<2x1xf32>
    %27 = vector.extract_strided_slice %19 {offsets = [1, 0], sizes = [1, 2], strides = [1, 1]} : vector<2x2xf32> to vector<1x2xf32>
    %28 = vector.broadcast %26 : vector<2x1xf32> to vector<2x2xf32>
    %29 = vector.broadcast %27 : vector<1x2xf32> to vector<2x2xf32>
    %30 = arith.mulf %28, %29 : vector<2x2xf32>
    %31 = arith.addf %25, %30 : vector<2x2xf32>
    %32 = vector.extract_strided_slice %31 {offsets = [0, 0], sizes = [2, 1], strides = [1, 1]} : vector<2x2xf32> to vector<2x1xf32>
    %33 = vector.extract_strided_slice %2 {offsets = [0, 0], sizes = [1, 2], strides = [1, 1]} : vector<2x2xf32> to vector<1x2xf32>
    %34 = vector.broadcast %32 : vector<2x1xf32> to vector<2x2xf32>
    %35 = vector.broadcast %33 : vector<1x2xf32> to vector<2x2xf32>
    %36 = arith.mulf %34, %35 : vector<2x2xf32>
    %37 = arith.addf %3, %36 : vector<2x2xf32>
    %38 = vector.extract_strided_slice %31 {offsets = [0, 1], sizes = [2, 1], strides = [1, 1]} : vector<2x2xf32> to vector<2x1xf32>
    %39 = vector.extract_strided_slice %2 {offsets = [1, 0], sizes = [1, 2], strides = [1, 1]} : vector<2x2xf32> to vector<1x2xf32>
    %40 = vector.broadcast %38 : vector<2x1xf32> to vector<2x2xf32>
    %41 = vector.broadcast %39 : vector<1x2xf32> to vector<2x2xf32>
    %42 = arith.mulf %40, %41 : vector<2x2xf32>
    %43 = arith.addf %37, %42 : vector<2x2xf32>
    %cst = arith.constant dense<0.000000e+00> : vector<2xf32>
    %44 = vector.multi_reduction <add>, %43, %cst [1] : vector<2x2xf32> to vector<2xf32>
    %45 = vector.shape_cast %44 : vector<2xf32> to vector<2x1xf32>
    %cst_1 = arith.constant 2.000000e+00 : f32
    %46 = vector.broadcast %cst_1 : f32 to vector<2x1xf32>
    %47 = arith.divf %45, %46 : vector<2x1xf32>
    %48 = vector.broadcast %47 : vector<2x1xf32> to vector<2x2xf32>
    %49 = arith.subf %43, %48 : vector<2x2xf32>
    %50 = arith.mulf %49, %49 : vector<2x2xf32>
    %cst_2 = arith.constant dense<0.000000e+00> : vector<2xf32>
    %51 = vector.multi_reduction <add>, %50, %cst_2 [1] : vector<2x2xf32> to vector<2xf32>
    %52 = vector.shape_cast %51 : vector<2xf32> to vector<2x1xf32>
    %cst_3 = arith.constant 2.000000e+00 : f32
    %53 = vector.broadcast %cst_3 : f32 to vector<2x1xf32>
    %54 = arith.divf %52, %53 : vector<2x1xf32>
    %55 = vector.broadcast %47 : vector<2x1xf32> to vector<2x2xf32>
    %56 = arith.subf %43, %55 : vector<2x2xf32>
    %cst_4 = arith.constant 9.99999974E-6 : f32
    %57 = vector.broadcast %cst_4 : f32 to vector<2x1xf32>
    %58 = arith.addf %54, %57 : vector<2x1xf32>
    %59 = math.rsqrt %58 : vector<2x1xf32>
    %60 = vector.broadcast %59 : vector<2x1xf32> to vector<2x2xf32>
    %61 = arith.mulf %56, %60 : vector<2x2xf32>
    %62 = vector.broadcast %4 : vector<2x1xf32> to vector<2x2xf32>
    %63 = arith.mulf %61, %62 : vector<2x2xf32>
    %64 = vector.broadcast %5 : vector<2x1xf32> to vector<2x2xf32>
    %65 = arith.addf %63, %64 : vector<2x2xf32>
    %cst_5 = arith.constant dense<0xFF800000> : vector<2xf32>
    %66 = vector.multi_reduction <maximumf>, %65, %cst_5 [1] : vector<2x2xf32> to vector<2xf32>
    %67 = vector.shape_cast %66 : vector<2xf32> to vector<2x1xf32>
    %68 = vector.broadcast %67 : vector<2x1xf32> to vector<2x2xf32>
    %69 = arith.subf %65, %68 : vector<2x2xf32>
    %70 = math.exp %69 : vector<2x2xf32>
    %cst_6 = arith.constant dense<0.000000e+00> : vector<2xf32>
    %71 = vector.multi_reduction <add>, %70, %cst_6 [1] : vector<2x2xf32> to vector<2xf32>
    %72 = vector.shape_cast %71 : vector<2xf32> to vector<2x1xf32>
    %73 = vector.broadcast %72 : vector<2x1xf32> to vector<2x2xf32>
    %74 = arith.divf %70, %73 : vector<2x2xf32>
    %75 = arith.addf %74, %6 : vector<2x2xf32>
    %c0_7 = arith.constant 0 : index
    %c0_8 = arith.constant 0 : index
    %76 = vector.load %arg1[%c0_7, %c0_8] : memref<2x2xf32, #tpu.memory_space<vmem>>, vector<2x2xf32>
    tpu.vector_store %arg1[%c0_7, %c0_8], %75 {strides = array<i32>} : memref<2x2xf32, #tpu.memory_space<vmem>>, vector<2x2xf32>,
    return
  }
}

</mosaic_0001>

<llo_original>
// kernel: model_forward.1
$region0: #{model_forward.1}
  #allocation0 [shape = 'u32[]', space=smem, size = 0x4, offset = 0x4, fixed_abs, tag = 'smem constant byte address 0x4 - core index']
  #allocation1 [shape = 'u32[72,128]{1,0:T(1,128)}', space=vmem, size = 0x9000, scoped, tag = 'internal scratch']
  %s0 = inlined_call_operand.vmem [shape: f32[2,16], index: 0, kind: input, shape index: {}]
  %s1 = inlined_call_operand.hbm [shape: f32[2,2], index: 1, kind: output, shape index: {}]
  %s2 = sld [smem:[#allocation0]]
  $region14: #{model_forward.1} parent=0
    _
  %s4 = ssub.s32 1, %s2
  %s5 = scalar_select 0, %s4, %s2
  $region1: #{model_forward.1} parent=0
    #allocation2 [shape = 'u8[1024]{0}', space=vmem, size = 0x400, scoped, tag = 'output window, operand 0, single buffered']
    #allocation3 [shape = 's32[1]{0}', space=sflag, size = 0x4, scoped, tag = 'scoped memory for model_forward.1']
    %6 = vsyncpa [#allocation3], 0
    // Predicated region
    $region2: #{model_forward.1} parent=1 // pred_check
      _
    $region3: #{model_forward.1} parent=1 // pred_check_branch
      %8 = sbr.rel (0) target = $region5
    $region4: #{model_forward.1} parent=1 // pred_region
      _
    $region5: #{model_forward.1} parent=1 // pred_fallthru
      _
    %v9 = vld [vmem:[%s0] sm:$0x3]
    %11 = vset.pattern.permute.xlu0 4
    %12 = vperm.xlu0 %11, %v9
    %v13 = vpop.permute.xlu0 %12
    %v15 = vperm.slane %v9, 0
    %v16 = vmul.f32 %v13, %v15
    %17 = vset.pattern.permute.xlu0 6
    %18 = vperm.xlu0 %17, %v9
    %v19 = vpop.permute.xlu0 %18
    %v21 = vperm.slane %v9, 1
    %v22 = vmul.f32 %v19, %v21
    %v23 = vadd.f32 %v16, %v22
    %24 = vset.pattern.permute.xlu0 5
    %25 = vperm.xlu0 %24, %v9
    %v26 = vpop.permute.xlu0 %25
    %v28 = vmul.f32 %v26, %v15
    %30 = vrot.lane.b32.xlu0 %v28, 126
    %v31 = vpop.permute.xlu0 %30
    %v33 = vadd.f32 %v23, %v31
    %34 = vset.pattern.permute.xlu0 7
    %35 = vperm.xlu0 %34, %v9
    %v36 = vpop.permute.xlu0 %35
    %v38 = vmul.f32 %v36, %v21
    %40 = vrot.lane.b32.xlu0 %v38, 126
    %v41 = vpop.permute.xlu0 %40
    %v43 = vadd.f32 %v33, %v41
    %45 = vset.pattern.permute.xlu0 0
    %46 = vperm.xlu0 %45, %v43
    %v47 = vpop.permute.xlu0 %46
    %v49 = vmul.f32 %v47, %v15
    %51 = vrot.lane.b32.xlu0 %v49, 2
    %v52 = vpop.permute.xlu0 %51
    %v54 = vadd.f32 %v9, %v52
    %55 = vset.pattern.permute.xlu0 1
    %56 = vperm.xlu0 %55, %v43
    %v57 = vpop.permute.xlu0 %56
    %v59 = vmul.f32 %v57, %v21
    %61 = vrot.lane.b32.xlu0 %v59, 2
    %v62 = vpop.permute.xlu0 %61
    %v64 = vadd.f32 %v54, %v62
    %66 = vrot.lane.b32.xlu0 %v64, 118
    %v67 = vpop.permute.xlu0 %66
    %vm69 = vcmask 9216
    %v70 = vsel %vm69, %v67, 0.0
    %71 = vadd.xlane.f32.xlu0 %v70
    %v72 = vpop.xlane.xlu0 %71
    %v73 = vrcp.pop 2.0
    %v74 = vmul.f32 2.0, %v73
    %v75 = vsub.f32 1.0, %v74
    %v76 = vmul.f32 %v73, %v75
    %v77 = vadd.f32 %v73, %v76
    %vm78 = vweird.f32 %v73
    %v79 = vsel %vm78, %v73, %v77
    %v80 = vmul.f32 %v72, %v79
    %v81 = vsub.f32 %v64, %v80
    %v82 = vmul.f32 %v81, %v81
    %84 = vrot.lane.b32.xlu0 %v82, 118
    %v85 = vpop.permute.xlu0 %84
    %v87 = vsel %vm69, %v85, 0.0
    %88 = vadd.xlane.f32.xlu0 %v87
    %v89 = vpop.xlane.xlu0 %88
    %v90 = vmul.f32 %v89, %v79
    %v91 = vadd.f32 %v90, 1e-05
    %v92 = vrsqrt.pop %v91
    %v93 = vmul.f32 %v92, %v91
    %v94 = vmul.f32 %v93, %v92
    %v95 = vmul.f32 0.5, %v94
    %v96 = vsub.f32 1.5, %v95
    %v97 = vmul.f32 %v92, %v96
    %vm98 = vweird.f32 %v91
    %vm99 = vweird.f32 %v92
    %vm100 = vmor %vm98, %vm99
    %v101 = vsel %vm100, %v92, %v97
    %v102 = vmul.f32 %v81, %v101
    %103 = vset.pattern.permute.xlu0 12
    %104 = vperm.xlu0 %103, %v9
    %v105 = vpop.permute.xlu0 %104
    %v107 = vmul.f32 %v102, %v105
    %108 = vset.pattern.permute.xlu0 13
    %109 = vperm.xlu0 %108, %v9
    %v110 = vpop.permute.xlu0 %109
    %v112 = vadd.f32 %v107, %v110
    %vm113 = vcmask 91216
    %v114 = vsel %vm113, %v112, -inf
    %115 = vmax.xlane.f32.xlu0 %v114
    %v116 = vpop.xlane.xlu0 %115
    %v117 = vsub.f32 %v112, %v116
    %v118 = vmul.f32 %v117, 1.442695
    %v119 = vpow.pop %v118
    %121 = vrot.lane.b32.xlu0 %v119, 118
    %v122 = vpop.permute.xlu0 %121
    %v124 = vsel %vm69, %v122, 0.0
    %125 = vadd.xlane.f32.xlu0 %v124
    %v126 = vpop.xlane.xlu0 %125
    %v127 = vrcp.pop %v126
    %v128 = vmul.f32 %v126, %v127
    %v129 = vsub.f32 1.0, %v128
    %v130 = vmul.f32 %v127, %v129
    %v131 = vadd.f32 %v127, %v130
    %vm132 = vweird.f32 %v126
    %vm133 = vweird.f32 %v127
    %vm134 = vmor %vm132, %vm133
    %v135 = vsel %vm134, %v127, %v131
    %v136 = vand.u32 2147483647, %v126
    %vm137 = vcmp.eq.f32.partialorder %v136, 8.507059e+37
    %v138 = vand.u32 %v126, 2147483648
    %v139 = vor.u32 1.1754944e-38, %v138
    %v140 = vsel %vm137, %v139, %v135
    %v141 = vmul.f32 %v119, %v140
    %142 = vrot.lane.b32.xlu0 %v9, 124
    %v143 = vpop.permute.xlu0 %142
    %v145 = vadd.f32 %v141, %v143
    %147 = vrot.lane.b32.xlu0 %v145, 118
    %v148 = vpop.permute.xlu0 %147
    %150 = vst.msk [vmem:[#allocation2] sm:$0x3] %vm69, %v148
    // Predicated region
    $region6: #{model_forward.1} parent=1 // pred_check
      _
    $region7: #{model_forward.1} parent=1 // pred_check_branch
      %152 = sbr.rel (0) target = $region9
    $region8: #{model_forward.1} parent=1 // pred_region
      %154 = vsyncadd [#allocation3], 0
      %s156 = sshll.u32 [#allocation2], 4
      %s157 = int_to_ptr.vmem [resolvable:$true] %s156
      %s158 = sshll.u32 %s1, 4
      %s159 = int_to_ptr.hbm [resolvable:$true] %s158
      %161 = dma.vmem_to_hbm [thread:$0]  %s157, 32, %s159, [#allocation3]
    $region9: #{model_forward.1} parent=1 // pred_fallthru
      _
    // Predicated region
    $region10: #{model_forward.1} parent=1 // pred_check
      _
    $region11: #{model_forward.1} parent=1 // pred_check_branch
      %163 = sbr.rel (0) target = $region13
    $region12: #{model_forward.1} parent=1 // pred_region
      %165 = dma.done [#allocation3], 32
    $region13: #{model_forward.1} parent=1 // pred_fallthru
      _
    %166 = vsyncpa [#allocation3], 1

</llo_original>
